<compile_context>
chip_gen: v5e
topology: v5e:2x2
jax: 0.10.0
libtpu: 0.0.40
codegen_flags: <defaults>
</compile_context>

<pallas_src>
import functools

import numpy as np
import jax
import jax.numpy as jnp
from jax.experimental import pallas as pl
from jax.experimental.pallas import tpu as pltpu

NB_VIEWS = 12
CANONICAL_ELEV = 35.0
CANONICAL_DIST = 2.2
SHAPE_FEAT = 64          # small stand-in for shape_features_size=512
BN_EPS = 1e-5


def _rup(x, m):
    return ((x + m - 1) // m) * m


# -----------------------------------------------------------------------------
# Kernel
# -----------------------------------------------------------------------------
def _view_selector_kernel(x_ref, w_ref, bp_ref, out_ref, *,
                          offs, in_dims, out_dims, O):
    """x: (TB, F) shape features (compute dtype).
    w_ref: packed, zero-padded weight slab (R, Wmax) (compute dtype), BN folded.
    bp_ref: (8, Wmax) f32 slab: rows 0..4 = biases b1..b5 (BN + const-column
            folds applied), row 5 = base (azim|elev), row 6 = scale (180/N|90).
    Dropout / input_view_noise are identity in eval mode.
    """
    cdt = w_ref.dtype
    h = x_ref[...]

    # 4x (Linear + folded-BN + ReLU). Static Python loop -> unrolled at trace.
    for li in range(4):
        r0 = offs[li]
        y = jnp.dot(h, w_ref[r0:r0 + in_dims[li], :out_dims[li]],
                    preferred_element_type=jnp.float32)
        y = y + bp_ref[li:li + 1, :out_dims[li]]
        h = jnp.maximum(y, 0.0).astype(cdt)     # ReLU in f32, repack to cdt

    # Final Linear + Tanh (MLP([2N,2N], act=None, norm=False) ; nn.Tanh())
    r0 = offs[4]
    z = jnp.dot(h, w_ref[r0:r0 + in_dims[4], :O],
                preferred_element_type=jnp.float32)
    z = z + bp_ref[4:5, :O]
    adj = jnp.tanh(z)

    base = bp_ref[5:6, :O]                       # azim_base | elev_base
    scale = bp_ref[6:7, :O]                      # 180/N     | 90
    out_ref[...] = base + adj * scale            # lane-dense (TB, 2N) f32


# -----------------------------------------------------------------------------
# Parameter init / reference
# -----------------------------------------------------------------------------
def init_params(key):
    """Deterministic init of the view_transformer parameters (eval-mode BN stats)."""
    dims = [SHAPE_FEAT + 2 * NB_VIEWS, SHAPE_FEAT, SHAPE_FEAT,
            5 * NB_VIEWS, 2 * NB_VIEWS]
    keys = jax.random.split(key, 10)
    ki = 0
    params = {}
    for i in range(4):
        fan_in, fan_out = dims[i], dims[i + 1]
        bound = 1.0 / np.sqrt(fan_in)
        params[f"w{i+1}"] = jax.random.uniform(
            keys[ki], (fan_in, fan_out), minval=-bound, maxval=bound,
            dtype=jnp.float32); ki += 1
        params[f"b{i+1}"] = jax.random.uniform(
            keys[ki], (fan_out,), minval=-bound, maxval=bound,
            dtype=jnp.float32); ki += 1
        params[f"gamma{i+1}"] = jnp.ones((fan_out,), jnp.float32)
        params[f"beta{i+1}"] = jnp.zeros((fan_out,), jnp.float32)
        params[f"mean{i+1}"] = jnp.zeros((fan_out,), jnp.float32)
        params[f"var{i+1}"] = jnp.ones((fan_out,), jnp.float32)
    fan_in = 2 * NB_VIEWS
    bound = 1.0 / np.sqrt(fan_in)
    params["w5"] = jax.random.uniform(
        keys[ki], (fan_in, fan_in), minval=-bound, maxval=bound,
        dtype=jnp.float32); ki += 1
    params["b5"] = jax.random.uniform(
        keys[ki], (fan_in,), minval=-bound, maxval=bound,
        dtype=jnp.float32); ki += 1
    return params


def _base_views():
    """Circular view grid: azim = linspace(-180, 180, N+1)[:-1], elev = const."""
    azim = jnp.linspace(-180.0, 180.0, NB_VIEWS + 1)[:-1].astype(jnp.float32)
    elev = jnp.full((NB_VIEWS,), CANONICAL_ELEV, jnp.float32)
    return azim, elev


def reference_forward(shape_features, params):
    """Pure-JAX reference of the PyTorch forward (eval mode)."""
    B = shape_features.shape[0]
    N = NB_VIEWS
    azim_base, elev_base = _base_views()
    azim = jnp.broadcast_to(azim_base[None, :], (B, N))
    elev = jnp.broadcast_to(elev_base[None, :], (B, N))
    dist = jnp.full((B, N), CANONICAL_DIST, jnp.float32)
    h = jnp.concatenate([shape_features.astype(jnp.float32), azim, elev], axis=1)
    for i in range(4):
        h = h @ params[f"w{i+1}"] + params[f"b{i+1}"]
        h = ((h - params[f"mean{i+1}"]) / jnp.sqrt(params[f"var{i+1}"] + BN_EPS)
             * params[f"gamma{i+1}"] + params[f"beta{i+1}"])
        h = jnp.maximum(h, 0.0)
    adj = jnp.tanh(h @ params["w5"] + params["b5"])
    return (azim + adj[:, :N] * 180.0 / N, elev + adj[:, N:] * 90.0, dist)


# -----------------------------------------------------------------------------
# Host-side fold + pack
# -----------------------------------------------------------------------------
def _fold_and_pack(params, F, compute_dtype):
    """Fold eval-BN + constant azim/elev columns; pack into two slabs."""
    N = NB_VIEWS
    H = params["w1"].shape[1]                    # shape_features_size
    H3, O = 5 * N, 2 * N                         # 60, 24
    H3P, OP = _rup(H3, 8), _rup(O, 8)            # 64, 32 (sublane aligned)
    azim_base, elev_base = _base_views()
    ve = jnp.concatenate([azim_base, elev_base])  # constant input columns

    ws, bs = [], []
    for i in range(4):
        g, be = params[f"gamma{i+1}"], params[f"beta{i+1}"]
        mean, var = params[f"mean{i+1}"], params[f"var{i+1}"]
        s = g / jnp.sqrt(var + BN_EPS)
        t = be - mean * s
        ws.append(params[f"w{i+1}"] * s[None, :])
        bs.append(params[f"b{i+1}"] * s + t)
    # fold constant azim/elev columns of layer 1 into its bias
    bs[0] = bs[0] + ve @ ws[0][F:, :]
    ws[0] = ws[0][:F, :]
    ws.append(params["w5"])
    bs.append(params["b5"])

    # Zero-padded layer sizes (padding contributes exact zeros through ReLU):
    #   L1: F->H,  L2: H->H,  L3: H->H3P (logical H3),
    #   L4: H3P->OP (logical O),  L5: OP->O.
    padded_rows = [_rup(F, 8), _rup(H, 8), _rup(H, 8), H3P, OP]
    offs = [0]
    for pr in padded_rows[:-1]:
        offs.append(offs[-1] + pr)
    R = offs[-1] + padded_rows[-1]
    Wmax = max(H, H3P, OP, O)

    w_slab = jnp.zeros((R, Wmax), jnp.float32)
    for i, w in enumerate(ws):
        w_slab = w_slab.at[offs[i]:offs[i] + w.shape[0], :w.shape[1]].set(w)

    bp = jnp.zeros((8, Wmax), jnp.float32)
    for i, b in enumerate(bs):
        bp = bp.at[i, :b.shape[0]].set(b)
    bp = bp.at[5, :O].set(jnp.concatenate([azim_base, elev_base]))
    bp = bp.at[6, :O].set(jnp.concatenate(
        [jnp.full((N,), 180.0 / N, jnp.float32),
         jnp.full((N,), 90.0, jnp.float32)]))

    meta = dict(offs=tuple(offs),
                in_dims=(F, H, H, H3P, OP),
                out_dims=(H, H, H3P, OP),
                O=O)
    return w_slab.astype(compute_dtype), bp, meta


def _choose_tile(B, batch_tile):
    batch_tile = max(8, (batch_tile // 8) * 8)
    if B > batch_tile:
        return batch_tile                         # grid >= 2 automatically
    if B <= 8:
        return B                                  # single full-array block
    # Split mid-size batches into >=2 blocks so both v7x TensorCores get work.
    return min(batch_tile, _rup(-(-B // 2), 8))


# -----------------------------------------------------------------------------
# Wrapper
# -----------------------------------------------------------------------------
def learned_circular_view_selector(shape_features, params, *,
                                   batch_tile=4096,
                                   compute_dtype=jnp.float32,
                                   min_pallas_batch=512,
                                   force_pallas=False):
    """Forward pass. Returns (azim, elev, dist), each (B, NB_VIEWS) float32."""
    B, F = shape_features.shape
    N = NB_VIEWS

    # Launch-overhead-bound regime: let plain XLA handle tiny batches.
    if B < min_pallas_batch and not force_pallas:
        return reference_forward(shape_features, params)

    w_slab, bp_slab, meta = _fold_and_pack(params, F, compute_dtype)
    R, Wm = w_slab.shape
    O = 2 * N

    TB = _choose_tile(B, batch_tile)
    grid = (pl.cdiv(B, TB),)                      # ragged last tile: OOB reads
                                                  # are garbage rows, OOB writes
                                                  # are clipped -> no host pad.
    x = shape_features.astype(compute_dtype)

    kernel = functools.partial(_view_selector_kernel, **meta)

    isz = np.dtype(compute_dtype).itemsize
    est = (2 * TB * F * isz            # double-buffered x tile
           + 2 * TB * O * 4            # double-buffered output tile (f32)
           + R * Wm * isz + 8 * Wm * 4  # resident weight + bias slabs
           + 4 * TB * max(Wm, F) * 4)  # live f32 intermediates (generous)
    vmem_limit = int(min(max(2 * est, 16 << 20), 48 << 20))  # v7x-safe cap

    fn = pl.pallas_call(
        kernel,
        grid=grid,
        in_specs=[pl.BlockSpec((TB, F), lambda i: (i, 0)),
                  pl.BlockSpec((R, Wm), lambda i: (0, 0)),   # VMEM-resident
                  pl.BlockSpec((8, Wm), lambda i: (0, 0))],  # VMEM-resident
        out_specs=pl.BlockSpec((TB, O), lambda i: (i, 0)),
        out_shape=jax.ShapeDtypeStruct((B, O), jnp.float32),
        compiler_params=pltpu.CompilerParams(
            dimension_semantics=("parallel",),    # shards batch across TCs
            vmem_limit_bytes=vmem_limit),
    )
    out = fn(x, w_slab, bp_slab)

    azim_out = out[:, :N]
    elev_out = out[:, N:]
    dist_out = jnp.full((B, N), CANONICAL_DIST, jnp.float32)  # passthrough
    return azim_out, elev_out, dist_out


# -----------------------------------------------------------------------------
# Self-test
# -----------------------------------------------------------------------------
if __name__ == "__main__":
    key = jax.random.PRNGKey(0)
    k_feat, k_param, k_feat2 = jax.random.split(key, 3)
    params = init_params(k_param)

    # --- small batch, f32, strict check (kernel forced on) ------------------
    B = 2
    shape_features = jax.random.normal(k_feat, (B, SHAPE_FEAT), dtype=jnp.float32)
    azim_out, elev_out, dist_out = learned_circular_view_selector(
        shape_features, params, force_pallas=True)
    jax.block_until_ready((azim_out, elev_out, dist_out))

    azim_ref, elev_ref, dist_ref = reference_forward(shape_features, params)
    assert azim_out.shape == (B, NB_VIEWS)
    assert elev_out.shape == (B, NB_VIEWS)
    assert dist_out.shape == (B, NB_VIEWS)
    assert bool(jnp.all(jnp.isfinite(azim_out)))
    assert bool(jnp.all(jnp.isfinite(elev_out)))
    assert bool(jnp.allclose(azim_out, azim_ref, atol=1e-3, rtol=1e-3))
    assert bool(jnp.allclose(elev_out, elev_ref, atol=1e-3, rtol=1e-3))
    assert bool(jnp.allclose(dist_out, CANONICAL_DIST))

    # --- larger ragged batch, multi-step grid, bf16 compute -----------------
    B2 = 600
    x_big = jax.random.normal(k_feat2, (B2, SHAPE_FEAT), dtype=jnp.float32)
    a2, e2, d2 = learned_circular_view_selector(
        x_big, params, batch_tile=256, compute_dtype=jnp.bfloat16,
        force_pallas=True)
    jax.block_until_ready((a2, e2, d2))
    a2r, e2r, d2r = reference_forward(x_big, params)
    assert a2.shape == (B2, NB_VIEWS) and e2.shape == (B2, NB_VIEWS)
    assert bool(jnp.all(jnp.isfinite(a2))) and bool(jnp.all(jnp.isfinite(e2)))
    # bf16 sanity (strict semantics already validated by the f32 path above)
    assert bool(jnp.allclose(a2, a2r, atol=3.0))
    assert bool(jnp.allclose(e2, e2r, atol=3.0))
    assert bool(jnp.allclose(d2, CANONICAL_DIST))

    print("KERNEL_OK")
</pallas_src>

<mosaic_0001>
module attributes {stable_mosaic.version = 11 : i64} {
  func.func @_view_selector_kernel(%arg0: i32, %arg1: memref<2x64xf32, #tpu.memory_space<vmem>>, %arg2: memref<280x64xf32, #tpu.memory_space<vmem>>, %arg3: memref<8x64xf32, #tpu.memory_space<vmem>>, %arg4: memref<2x24xf32, #tpu.memory_space<vmem>>) attributes {dimension_semantics = [#tpu.dimension_semantics<parallel>], iteration_bounds = array<i64: 1>, scalar_prefetch = 0 : i64, scratch_operands = 0 : i64, tpu.core_type = #tpu.core_type<tc>, window_params = [{transform_indices = @transform_0, window_bounds = array<i64: 2, 64>}, {pipeline_mode = #tpu.pipeline_mode<synchronous>, transform_indices = @transform_1, window_bounds = array<i64: 280, 64>}, {pipeline_mode = #tpu.pipeline_mode<synchronous>, transform_indices = @transform_2, window_bounds = array<i64: 8, 64>}, {transform_indices = @transform_3, window_bounds = array<i64: 2, 24>}]} {
    %c0 = arith.constant 0 : index
    %c0_0 = arith.constant 0 : index
    %0 = vector.load %arg1[%c0, %c0_0] : memref<2x64xf32, #tpu.memory_space<vmem>>, vector<2x64xf32>
    %c0_1 = arith.constant 0 : index
    %c0_2 = arith.constant 0 : index
    %1 = vector.load %arg2[%c0_1, %c0_2] : memref<280x64xf32, #tpu.memory_space<vmem>>, vector<64x64xf32>
    %cst = arith.constant dense<0.000000e+00> : vector<2x64xf32>
    %2 = tpu.matmul %0, %1, %cst {dimension_numbers = #tpu.dot_dimension_numbers<[1], [0], [0], [1], [0, 0, 1, 1], [], []>} : vector<2x64xf32>, vector<64x64xf32>, vector<2x64xf32> -> vector<2x64xf32>
    %c0_3 = arith.constant 0 : index
    %c0_4 = arith.constant 0 : index
    %3 = vector.load %arg3[%c0_3, %c0_4] : memref<8x64xf32, #tpu.memory_space<vmem>>, vector<1x64xf32>
    %4 = vector.broadcast %3 : vector<1x64xf32> to vector<2x64xf32>
    %5 = arith.addf %2, %4 : vector<2x64xf32>
    %cst_5 = arith.constant 0.000000e+00 : f32
    %6 = vector.broadcast %cst_5 : f32 to vector<2x64xf32>
    %7 = arith.maximumf %5, %6 : vector<2x64xf32>
    %c64 = arith.constant 64 : index
    %c0_6 = arith.constant 0 : index
    %8 = vector.load %arg2[%c64, %c0_6] : memref<280x64xf32, #tpu.memory_space<vmem>>, vector<64x64xf32>
    %cst_7 = arith.constant dense<0.000000e+00> : vector<2x64xf32>
    %9 = tpu.matmul %7, %8, %cst_7 {dimension_numbers = #tpu.dot_dimension_numbers<[1], [0], [0], [1], [0, 0, 1, 1], [], []>} : vector<2x64xf32>, vector<64x64xf32>, vector<2x64xf32> -> vector<2x64xf32>
    %c1 = arith.constant 1 : index
    %c0_8 = arith.constant 0 : index
    %10 = vector.load %arg3[%c1, %c0_8] : memref<8x64xf32, #tpu.memory_space<vmem>>, vector<1x64xf32>
    %11 = vector.broadcast %10 : vector<1x64xf32> to vector<2x64xf32>
    %12 = arith.addf %9, %11 : vector<2x64xf32>
    %cst_9 = arith.constant 0.000000e+00 : f32
    %13 = vector.broadcast %cst_9 : f32 to vector<2x64xf32>
    %14 = arith.maximumf %12, %13 : vector<2x64xf32>
    %c128 = arith.constant 128 : index
    %c0_10 = arith.constant 0 : index
    %15 = vector.load %arg2[%c128, %c0_10] : memref<280x64xf32, #tpu.memory_space<vmem>>, vector<64x64xf32>
    %cst_11 = arith.constant dense<0.000000e+00> : vector<2x64xf32>
    %16 = tpu.matmul %14, %15, %cst_11 {dimension_numbers = #tpu.dot_dimension_numbers<[1], [0], [0], [1], [0, 0, 1, 1], [], []>} : vector<2x64xf32>, vector<64x64xf32>, vector<2x64xf32> -> vector<2x64xf32>
    %c2 = arith.constant 2 : index
    %c0_12 = arith.constant 0 : index
    %17 = vector.load %arg3[%c2, %c0_12] : memref<8x64xf32, #tpu.memory_space<vmem>>, vector<1x64xf32>
    %18 = vector.broadcast %17 : vector<1x64xf32> to vector<2x64xf32>
    %19 = arith.addf %16, %18 : vector<2x64xf32>
    %cst_13 = arith.constant 0.000000e+00 : f32
    %20 = vector.broadcast %cst_13 : f32 to vector<2x64xf32>
    %21 = arith.maximumf %19, %20 : vector<2x64xf32>
    %c192 = arith.constant 192 : index
    %c0_14 = arith.constant 0 : index
    %22 = vector.load %arg2[%c192, %c0_14] : memref<280x64xf32, #tpu.memory_space<vmem>>, vector<64x24xf32>
    %cst_15 = arith.constant dense<0.000000e+00> : vector<2x24xf32>
    %23 = tpu.matmul %21, %22, %cst_15 {dimension_numbers = #tpu.dot_dimension_numbers<[1], [0], [0], [1], [0, 0, 1, 1], [], []>} : vector<2x64xf32>, vector<64x24xf32>, vector<2x24xf32> -> vector<2x24xf32>
    %c3 = arith.constant 3 : index
    %c0_16 = arith.constant 0 : index
    %24 = vector.load %arg3[%c3, %c0_16] : memref<8x64xf32, #tpu.memory_space<vmem>>, vector<1x24xf32>
    %25 = vector.broadcast %24 : vector<1x24xf32> to vector<2x24xf32>
    %26 = arith.addf %23, %25 : vector<2x24xf32>
    %cst_17 = arith.constant 0.000000e+00 : f32
    %27 = vector.broadcast %cst_17 : f32 to vector<2x24xf32>
    %28 = arith.maximumf %26, %27 : vector<2x24xf32>
    %c256 = arith.constant 256 : index
    %c0_18 = arith.constant 0 : index
    %29 = vector.load %arg2[%c256, %c0_18] : memref<280x64xf32, #tpu.memory_space<vmem>>, vector<24x24xf32>
    %cst_19 = arith.constant dense<0.000000e+00> : vector<2x24xf32>
    %30 = tpu.matmul %28, %29, %cst_19 {dimension_numbers = #tpu.dot_dimension_numbers<[1], [0], [0], [1], [0, 0, 1, 1], [], []>} : vector<2x24xf32>, vector<24x24xf32>, vector<2x24xf32> -> vector<2x24xf32>
    %c4 = arith.constant 4 : index
    %c0_20 = arith.constant 0 : index
    %31 = vector.load %arg3[%c4, %c0_20] : memref<8x64xf32, #tpu.memory_space<vmem>>, vector<1x24xf32>
    %32 = vector.broadcast %31 : vector<1x24xf32> to vector<2x24xf32>
    %33 = arith.addf %30, %32 : vector<2x24xf32>
    %34 = math.tanh %33 : vector<2x24xf32>
    %c5 = arith.constant 5 : index
    %c0_21 = arith.constant 0 : index
    %35 = vector.load %arg3[%c5, %c0_21] : memref<8x64xf32, #tpu.memory_space<vmem>>, vector<1x24xf32>
    %c6 = arith.constant 6 : index
    %c0_22 = arith.constant 0 : index
    %36 = vector.load %arg3[%c6, %c0_22] : memref<8x64xf32, #tpu.memory_space<vmem>>, vector<1x24xf32>
    %37 = vector.broadcast %36 : vector<1x24xf32> to vector<2x24xf32>
    %38 = arith.mulf %34, %37 : vector<2x24xf32>
    %39 = vector.broadcast %35 : vector<1x24xf32> to vector<2x24xf32>
    %40 = arith.addf %39, %38 : vector<2x24xf32>
    %c0_23 = arith.constant 0 : index
    %c0_24 = arith.constant 0 : index
    %41 = vector.load %arg4[%c0_23, %c0_24] : memref<2x24xf32, #tpu.memory_space<vmem>>, vector<2x24xf32>
    tpu.vector_store %arg4[%c0_23, %c0_24], %40 {strides = array<i32>} : memref<2x24xf32, #tpu.memory_space<vmem>>, vector<2x24xf32>,
    return
  }
  func.func @transform_0(%arg0: i32) -> (i32, i32) {
    %c0_i32 = arith.constant 0 : i32
    %c0_i32_0 = arith.constant 0 : i32
    return %arg0, %c0_i32 : i32, i32
  }
  func.func @transform_1(%arg0: i32) -> (i32, i32) {
    %c0_i32 = arith.constant 0 : i32
    %c0_i32_0 = arith.constant 0 : i32
    %c0_i32_1 = arith.constant 0 : i32
    return %c0_i32, %c0_i32_0 : i32, i32
  }
  func.func @transform_2(%arg0: i32) -> (i32, i32) {
    %c0_i32 = arith.constant 0 : i32
    %c0_i32_0 = arith.constant 0 : i32
    %c0_i32_1 = arith.constant 0 : i32
    return %c0_i32, %c0_i32_0 : i32, i32
  }
  func.func @transform_3(%arg0: i32) -> (i32, i32) {
    %c0_i32 = arith.constant 0 : i32
    %c0_i32_0 = arith.constant 0 : i32
    return %arg0, %c0_i32 : i32, i32
  }
}

</mosaic_0001>

<llo_original>
// kernel: tpu_custom_call.1
$region0: #{tpu_custom_call.1}
  #allocation0 [shape = 'u32[]', space=smem, size = 0x4, offset = 0x4, fixed_abs, tag = 'smem constant byte address 0x4 - core index']
  #allocation1 [shape = 'u32[72,128]{1,0:T(1,128)}', space=vmem, size = 0x9000, scoped, tag = 'internal scratch']
  %s0 = inlined_call_operand.vmem [shape: f32[2,64], index: 0, kind: input, shape index: {}]
  %s1 = inlined_call_operand.vmem [shape: f32[280,64], index: 1, kind: input, shape index: {}]
  %s2 = inlined_call_operand.vmem [shape: f32[8,64], index: 2, kind: input, shape index: {}]
  %s3 = inlined_call_operand.hbm [shape: f32[2,24], index: 3, kind: output, shape index: {}]
  %s4 = sld [smem:[#allocation0]]
  $region22: #{tpu_custom_call.1} parent=0
    _
  %s6 = ssub.s32 1, %s4
  %s7 = scalar_select 0, %s6, %s4
  $region1: #{tpu_custom_call.1} parent=0
    #allocation2 [shape = 'u8[1024]{0}', space=vmem, size = 0x400, scoped, tag = 'output window, operand 0, single buffered']
    #allocation3 [shape = 's32[1]{0}', space=sflag, size = 0x4, scoped, tag = 'scoped memory for tpu_custom_call.1']
    %8 = vsyncpa [#allocation3], 0
    // Predicated region
    $region2: #{tpu_custom_call.1} parent=1 // pred_check
      _
    $region3: #{tpu_custom_call.1} parent=1 // pred_check_branch
      %10 = sbr.rel (0) target = $region5
    $region4: #{tpu_custom_call.1} parent=1 // pred_region
      _
    $region5: #{tpu_custom_call.1} parent=1 // pred_fallthru
      _
    // Predicated region
    $region6: #{tpu_custom_call.1} parent=1 // pred_check
      _
    $region7: #{tpu_custom_call.1} parent=1 // pred_check_branch
      %12 = sbr.rel (0) target = $region9
    $region8: #{tpu_custom_call.1} parent=1 // pred_region
      _
    $region9: #{tpu_custom_call.1} parent=1 // pred_fallthru
      _
    // Predicated region
    $region10: #{tpu_custom_call.1} parent=1 // pred_check
      _
    $region11: #{tpu_custom_call.1} parent=1 // pred_check_branch
      %14 = sbr.rel (0) target = $region13
    $region12: #{tpu_custom_call.1} parent=1 // pred_region
      _
    $region13: #{tpu_custom_call.1} parent=1 // pred_fallthru
      _
    %v15 = vld [vmem:[%s0] sm:$0x3]
    %v16 = vld [vmem:[%s1] sm:$0xff]
    %v17 = vld [vmem:[%s1 + $0x8] sm:$0xff]
    %v18 = vld [vmem:[%s1 + $0x10] sm:$0xff]
    %v19 = vld [vmem:[%s1 + $0x18] sm:$0xff]
    %v20 = vld [vmem:[%s1 + $0x20] sm:$0xff]
    %v21 = vld [vmem:[%s1 + $0x28] sm:$0xff]
    %v22 = vld [vmem:[%s1 + $0x30] sm:$0xff]
    %v23 = vld [vmem:[%s1 + $0x38] sm:$0xff]
    %v24 = vld [vmem:[%s2] sm:$0x1]
    %v25 = vperm.slane %v24, 0
    %vm26 = vcmask 523264
    %v28 = vsel %vm26, %v15, 0
    %30 = vmatpush.msra.mxu0 0.0
    %31 = vmatpush.msra.mxu0 0.0
    %32 = vmatpush.msra.mxu0 0.0
    %33 = vmatpush.msra.mxu0 0.0
    %34 = vmatpush.msra.mxu0 0.0
    %35 = vmatpush.msra.mxu0 0.0
    %36 = vmatpush.msra.mxu0 0.0
    %37 = vmatpush.msra.mxu0 0.0
    %38 = vmatpush.msra.mxu0 %v23
    %39 = vmatpush.msra.mxu0 %v22
    %40 = vmatpush.msra.mxu0 %v21
    %41 = vmatpush.msra.mxu0 %v20
    %42 = vmatpush.msra.mxu0 %v19
    %43 = vmatpush.msra.mxu0 %v18
    %44 = vmatpush.msra.mxu0 %v17
    %45 = vmatpush.msra.mxu0 %v16
    %46 = vmatmul.f32.gmra.mxu0 %v28
    %v47 = vpop.f32.mrf.mxu0
    %v48 = vadd.f32 %v25, %v47
    %49 = vdwg.mxu0
    %v50 = vmax.f32 %v48, 0.0
    %v51 = vld [vmem:[%s1 + $0x40] sm:$0xff]
    %v52 = vld [vmem:[%s1 + $0x48] sm:$0xff]
    %v53 = vld [vmem:[%s1 + $0x50] sm:$0xff]
    %v54 = vld [vmem:[%s1 + $0x58] sm:$0xff]
    %v55 = vld [vmem:[%s1 + $0x60] sm:$0xff]
    %v56 = vld [vmem:[%s1 + $0x68] sm:$0xff]
    %v57 = vld [vmem:[%s1 + $0x70] sm:$0xff]
    %v58 = vld [vmem:[%s1 + $0x78] sm:$0xff]
    %v59 = vld [vmem:[%s2 + $0x1] sm:$0x1]
    %v60 = vperm.slane %v59, 0
    %v62 = vsel %vm26, %v50, 0
    %64 = vmatpush.msra.mxu0 0.0
    %65 = vmatpush.msra.mxu0 0.0
    %66 = vmatpush.msra.mxu0 0.0
    %67 = vmatpush.msra.mxu0 0.0
    %68 = vmatpush.msra.mxu0 0.0
    %69 = vmatpush.msra.mxu0 0.0
    %70 = vmatpush.msra.mxu0 0.0
    %71 = vmatpush.msra.mxu0 0.0
    %72 = vmatpush.msra.mxu0 %v58
    %73 = vmatpush.msra.mxu0 %v57
    %74 = vmatpush.msra.mxu0 %v56
    %75 = vmatpush.msra.mxu0 %v55
    %76 = vmatpush.msra.mxu0 %v54
    %77 = vmatpush.msra.mxu0 %v53
    %78 = vmatpush.msra.mxu0 %v52
    %79 = vmatpush.msra.mxu0 %v51
    %80 = vmatmul.f32.gmra.mxu0 %v62
    %v81 = vpop.f32.mrf.mxu0
    %v82 = vadd.f32 %v60, %v81
    %83 = vdwg.mxu0
    %v84 = vmax.f32 %v82, 0.0
    %v85 = vld [vmem:[%s1 + $0x80] sm:$0xff]
    %v86 = vld [vmem:[%s1 + $0x88] sm:$0xff]
    %v87 = vld [vmem:[%s1 + $0x90] sm:$0xff]
    %v88 = vld [vmem:[%s1 + $0x98] sm:$0xff]
    %v89 = vld [vmem:[%s1 + $0xa0] sm:$0xff]
    %v90 = vld [vmem:[%s1 + $0xa8] sm:$0xff]
    %v91 = vld [vmem:[%s1 + $0xb0] sm:$0xff]
    %v92 = vld [vmem:[%s1 + $0xb8] sm:$0xff]
    %v93 = vld [vmem:[%s2 + $0x2] sm:$0x1]
    %v94 = vperm.slane %v93, 0
    %v96 = vsel %vm26, %v84, 0
    %98 = vmatpush.msra.mxu0 0.0
    %99 = vmatpush.msra.mxu0 0.0
    %100 = vmatpush.msra.mxu0 0.0
    %101 = vmatpush.msra.mxu0 0.0
    %102 = vmatpush.msra.mxu0 0.0
    %103 = vmatpush.msra.mxu0 0.0
    %104 = vmatpush.msra.mxu0 0.0
    %105 = vmatpush.msra.mxu0 0.0
    %106 = vmatpush.msra.mxu0 %v92
    %107 = vmatpush.msra.mxu0 %v91
    %108 = vmatpush.msra.mxu0 %v90
    %109 = vmatpush.msra.mxu0 %v89
    %110 = vmatpush.msra.mxu0 %v88
    %111 = vmatpush.msra.mxu0 %v87
    %112 = vmatpush.msra.mxu0 %v86
    %113 = vmatpush.msra.mxu0 %v85
    %114 = vmatmul.f32.gmra.mxu0 %v96
    %v115 = vpop.f32.mrf.mxu0
    %v116 = vadd.f32 %v94, %v115
    %117 = vdwg.mxu0
    %v118 = vmax.f32 %v116, 0.0
    %v119 = vld [vmem:[%s1 + $0xc0] sm:$0xff]
    %v120 = vld [vmem:[%s1 + $0xc8] sm:$0xff]
    %v121 = vld [vmem:[%s1 + $0xd0] sm:$0xff]
    %v122 = vld [vmem:[%s1 + $0xd8] sm:$0xff]
    %v123 = vld [vmem:[%s1 + $0xe0] sm:$0xff]
    %v124 = vld [vmem:[%s1 + $0xe8] sm:$0xff]
    %v125 = vld [vmem:[%s1 + $0xf0] sm:$0xff]
    %v126 = vld [vmem:[%s1 + $0xf8] sm:$0xff]
    %v127 = vld [vmem:[%s2 + $0x3] sm:$0x1]
    %v128 = vperm.slane %v127, 0
    %v130 = vsel %vm26, %v118, 0
    %132 = vmatpush.msra.mxu0 0.0
    %133 = vmatpush.msra.mxu0 0.0
    %134 = vmatpush.msra.mxu0 0.0
    %135 = vmatpush.msra.mxu0 0.0
    %136 = vmatpush.msra.mxu0 0.0
    %137 = vmatpush.msra.mxu0 0.0
    %138 = vmatpush.msra.mxu0 0.0
    %139 = vmatpush.msra.mxu0 0.0
    %140 = vmatpush.msra.mxu0 %v126
    %141 = vmatpush.msra.mxu0 %v125
    %142 = vmatpush.msra.mxu0 %v124
    %143 = vmatpush.msra.mxu0 %v123
    %144 = vmatpush.msra.mxu0 %v122
    %145 = vmatpush.msra.mxu0 %v121
    %146 = vmatpush.msra.mxu0 %v120
    %147 = vmatpush.msra.mxu0 %v119
    %148 = vmatmul.f32.gmra.mxu0 %v130
    %v149 = vpop.f32.mrf.mxu0
    %v150 = vadd.f32 %v128, %v149
    %151 = vdwg.mxu0
    %v152 = vmax.f32 %v150, 0.0
    %v153 = vld [vmem:[%s1 + $0x100] sm:$0xff]
    %v154 = vld [vmem:[%s1 + $0x108] sm:$0xff]
    %v155 = vld [vmem:[%s1 + $0x110] sm:$0xff]
    %v156 = vld [vmem:[%s2 + $0x4] sm:$0x1]
    %v157 = vperm.slane %v156, 0
    %vm158 = vcmask 195584
    %v160 = vsel %vm158, %v152, 0
    %162 = vmatpush.msra.mxu0 0.0
    %163 = vmatpush.msra.mxu0 0.0
    %164 = vmatpush.msra.mxu0 0.0
    %165 = vmatpush.msra.mxu0 0.0
    %166 = vmatpush.msra.mxu0 0.0
    %167 = vmatpush.msra.mxu0 0.0
    %168 = vmatpush.msra.mxu0 0.0
    %169 = vmatpush.msra.mxu0 0.0
    %170 = vmatpush.msra.mxu0 0.0
    %171 = vmatpush.msra.mxu0 0.0
    %172 = vmatpush.msra.mxu0 0.0
    %173 = vmatpush.msra.mxu0 0.0
    %174 = vmatpush.msra.mxu0 0.0
    %175 = vmatpush.msra.mxu0 %v155
    %176 = vmatpush.msra.mxu0 %v154
    %177 = vmatpush.msra.mxu0 %v153
    %178 = vmatmul.f32.gmra.mxu0 %v160
    %v179 = vpop.f32.mrf.mxu0
    %v180 = vadd.f32 %v157, %v179
    %181 = vdwg.mxu0
    %v182 = vtanh.pop %v180
    %v183 = vld [vmem:[%s2 + $0x5] sm:$0x1]
    %v184 = vld [vmem:[%s2 + $0x6] sm:$0x1]
    %v185 = vperm.slane %v184, 0
    %v186 = vmul.f32 %v182, %v185
    %v187 = vperm.slane %v183, 0
    %v188 = vadd.f32 %v187, %v186
    %vm189 = vcmask 189440
    %190 = vst.msk [vmem:[#allocation2] sm:$0x3] %vm189, %v188
    // Predicated region
    $region14: #{tpu_custom_call.1} parent=1 // pred_check
      _
    $region15: #{tpu_custom_call.1} parent=1 // pred_check_branch
      %192 = sbr.rel (0) target = $region17
    $region16: #{tpu_custom_call.1} parent=1 // pred_region
      %194 = vsyncadd [#allocation3], 0
      %s196 = sshll.u32 [#allocation2], 4
      %s197 = int_to_ptr.vmem [resolvable:$true] %s196
      %s198 = sshll.u32 %s3, 4
      %s199 = int_to_ptr.hbm [resolvable:$true] %s198
      %201 = dma.vmem_to_hbm [thread:$0]  %s197, 32, %s199, [#allocation3]
    $region17: #{tpu_custom_call.1} parent=1 // pred_fallthru
      _
    // Predicated region
    $region18: #{tpu_custom_call.1} parent=1 // pred_check
      _
    $region19: #{tpu_custom_call.1} parent=1 // pred_check_branch
      %203 = sbr.rel (0) target = $region21
    $region20: #{tpu_custom_call.1} parent=1 // pred_region
      %205 = dma.done [#allocation3], 32
    $region21: #{tpu_custom_call.1} parent=1 // pred_fallthru
      _
    %206 = vsyncpa [#allocation3], 1

</llo_original>
